<compile_context>
chip_gen: v6e
topology: v6e:2x2x1
jax: 0.10.0
libtpu: 0.0.40
codegen_flags: <defaults>
</compile_context>

<pallas_src>
import jax
import jax.numpy as jnp
from jax import lax
from jax.experimental import pallas as pl
from jax.experimental.pallas import tpu as pltpu


def _round_up(x, m):
    return ((x + m - 1) // m) * m


def _vmem_capacity_bytes():
    """Physical VMEM per TensorCore; conservative 64 MiB (v7x-safe) fallback."""
    try:
        info = pltpu.get_tpu_info()
        for attr in ("vmem_capacity_bytes", "vmem_size_bytes", "vmem_bytes"):
            v = getattr(info, attr, None)
            if v:
                return int(v)
    except Exception:
        pass
    return 64 * 1024 * 1024


def _pick_sub(h_extent):
    """Sub-chunk width for the in-kernel hidden loop (bounds the f32 intermediate)."""
    for cand in (256, 512, 128):
        if cand <= h_extent and h_extent % cand == 0:
            return cand
    return h_extent


def _make_full_kernel(n_sub, sub):
    """Whole hidden dim resident in VMEM: rows-only grid, no accumulator scratch."""

    def kernel(x_ref, w1_ref, b1_ref, w2_ref, b2_ref, o_ref):
        x = x_ref[...]                      # (tm, C) bf16
        tm = x.shape[0]
        c = o_ref.shape[-1]

        def body(s, acc):
            off = pl.multiple_of(s * sub, sub)
            # matmul1 (MXU, f32 acc) -> bias + ReLU (f32 VPU) -> bf16 cast -> matmul2.
            h = jnp.dot(x, w1_ref[:, pl.ds(off, sub)],
                        preferred_element_type=jnp.float32)
            h = jnp.maximum(h + b1_ref[:, pl.ds(off, sub)], 0.0)
            return acc + jnp.dot(h.astype(w2_ref.dtype), w2_ref[pl.ds(off, sub), :],
                                 preferred_element_type=jnp.float32)

        acc = lax.fori_loop(0, n_sub, body, jnp.zeros((tm, c), jnp.float32),
                            unroll=min(n_sub, 8))
        o_ref[...] = (acc + b2_ref[...]).astype(o_ref.dtype)

    return kernel


def _make_stream_kernel(n_sub, sub):
    """Hidden dim streamed over grid axis 1; f32 accumulator scratch across k."""

    def kernel(x_ref, w1_ref, b1_ref, w2_ref, b2_ref, o_ref, acc_ref):
        k = pl.program_id(1)

        @pl.when(k == 0)
        def _():
            acc_ref[...] = jnp.zeros_like(acc_ref)

        x = x_ref[...]                      # (tm, C) bf16

        def body(s, part):
            off = pl.multiple_of(s * sub, sub)
            h = jnp.dot(x, w1_ref[:, pl.ds(off, sub)],
                        preferred_element_type=jnp.float32)
            h = jnp.maximum(h + b1_ref[:, pl.ds(off, sub)], 0.0)
            return part + jnp.dot(h.astype(w2_ref.dtype), w2_ref[pl.ds(off, sub), :],
                                  preferred_element_type=jnp.float32)

        part = lax.fori_loop(0, n_sub, body, jnp.zeros(acc_ref.shape, jnp.float32),
                             unroll=min(n_sub, 8))
        acc_ref[...] += part                # single RMW of the (tm, C) scratch per k

        @pl.when(k == pl.num_programs(1) - 1)
        def _():
            o_ref[...] = (acc_ref[...] + b2_ref[...]).astype(o_ref.dtype)

    return kernel


def feedforward_pallas(x, w1, b1, w2, b2, *, tm=None, th=None, out_dtype=None):
    """relu(x @ w1 + b1) @ w2 + b2  (dropout = eval-mode identity).

    x: (B, T, C);  w1: (C, H), b1: (H,), w2: (H, C), b2: (C,)  with H = 4*C.
    """
    B, T, C = x.shape
    H = w1.shape[1]
    assert w1.shape == (C, H) and b1.shape == (H,)
    assert w2.shape == (H, C) and b2.shape == (C,)
    M = B * T
    out_dtype = jnp.dtype(out_dtype if out_dtype is not None else x.dtype)
    out_isz = out_dtype.itemsize

    # --- Per-generation VMEM budget ------------------------------------------
    vmem_cap = _vmem_capacity_bytes()
    hard_cap = int(vmem_cap * 0.82)          # headroom for Mosaic internal scratch
    budget = int(hard_cap * 0.90)

    # --- Padded problem sizes -------------------------------------------------
    # Rows: sublane-aligned tiles, and >=2 row tiles when possible so both v7x
    # TensorCores get work on the "parallel" axis.
    Mp = _round_up(M, 16) if M <= 256 else _round_up(M, 128)
    # Hidden: lane-aligned.  Padded W1 cols / b1 / W2 rows are zero, so
    # relu(0 + 0) * 0 contributes nothing.
    Hp = _round_up(H, 128)

    # --- Row tile --------------------------------------------------------------
    tm_auto = tm is None
    if tm_auto:
        for cand in (512, 256, 128):
            if Mp % cand == 0 and Mp // cand >= 2:
                tm = cand
                break
        else:
            half = Mp // 2
            tm = half if (half > 0 and half % 8 == 0) else Mp
    assert Mp % tm == 0, "padded rows must tile evenly"

    # --- Footprint models (conservative: double-buffered inputs/outputs) -------
    def footprint_full(tm_, sub_):
        w = 2 * (C * Hp + Hp * C) * 2                 # W1 + W2, bf16
        xb = 2 * tm_ * C * 2                          # x tile, bf16
        ob = 2 * tm_ * C * out_isz                    # out tile
        bias = 2 * (Hp + C) * 4
        tmp = tm_ * C * 4 + tm_ * sub_ * (4 + 2)      # f32 acc + h (f32 + bf16 cast)
        return w + xb + ob + bias + tmp

    def footprint_stream(tm_, th_, sub_, wbuf_):
        w = wbuf_ * (C * th_ + th_ * C) * 2
        xb = 2 * tm_ * C * 2
        ob = 2 * tm_ * C * out_isz
        bias = 2 * (th_ + C) * 4
        acc = tm_ * C * 4
        tmp = tm_ * C * 4 + tm_ * sub_ * (4 + 2)
        return w + xb + ob + bias + acc + tmp

    # --- Hidden tiling decision -------------------------------------------------
    sub_full = _pick_sub(Hp)
    if th is not None:
        th = min(th, Hp)
        use_full = th >= Hp
    else:
        use_full = footprint_full(tm, sub_full) <= budget

    wbuf = 2
    if use_full:
        footprint = footprint_full(tm, sub_full)
    else:
        if tm_auto:
            # Weight re-stream traffic scales as Mp/tm: grow tm if it fits...
            for cand in (2048, 1024):
                if (Mp % cand == 0 and Mp // cand >= 2
                        and footprint_stream(cand, 128, 128, 2) <= budget):
                    tm = cand
                    break
            # ...and shrink it if even the smallest hidden chunk doesn't fit.
            while tm >= 256 and footprint_stream(tm, 128, 128, 2) > budget:
                tm //= 2
        if th is None:
            for cand in (2048, 1024, 512, 256, 128):
                if Hp % cand == 0 and footprint_stream(tm, cand, _pick_sub(cand), 2) <= budget:
                    th = cand
                    break
            else:
                th = 128            # Hp is a multiple of 128 by construction
        assert Hp % th == 0, "padded hidden dim must tile evenly"
        sub_stream = _pick_sub(th)
        # Deeper weight buffering only when DMA-exposed streaming and budget allows.
        wbuf = 3 if footprint_stream(tm, th, sub_stream, 3) <= budget else 2
        footprint = footprint_stream(tm, th, sub_stream, wbuf)

    vmem_limit = min(hard_cap, max(footprint + (6 << 20), min(hard_cap, 24 << 20)))

    # --- Prepare operands (bf16 MXU inputs, f32 biases) -------------------------
    x2 = x.reshape(M, C).astype(jnp.bfloat16)
    if Mp != M:
        x2 = jnp.pad(x2, ((0, Mp - M), (0, 0)))
    w1b = w1.astype(jnp.bfloat16)
    w2b = w2.astype(jnp.bfloat16)
    b1r = b1.reshape(1, H).astype(jnp.float32)
    if Hp != H:
        w1b = jnp.pad(w1b, ((0, 0), (0, Hp - H)))
        w2b = jnp.pad(w2b, ((0, Hp - H), (0, 0)))
        b1r = jnp.pad(b1r, ((0, 0), (0, Hp - H)))
    b2r = b2.reshape(1, C).astype(jnp.float32)

    # --- Cost estimate consistent with the chosen tiling -------------------------
    n_row_tiles = Mp // tm
    weight_bytes = (C * Hp + Hp * C) * 2
    weight_traffic = weight_bytes * (1 if use_full else n_row_tiles)
    cost = pl.CostEstimate(
        flops=4 * Mp * C * Hp,                 # two matmuls, 2*M*C*H each
        transcendentals=0,
        bytes_accessed=(Mp * C * 2             # x (bf16)
                        + weight_traffic       # W1 + W2 (re-streamed if tiled)
                        + (Hp + C) * 4         # biases (f32)
                        + Mp * C * out_isz),   # output
    )

    if use_full:
        n_sub = Hp // sub_full
        out = pl.pallas_call(
            _make_full_kernel(n_sub, sub_full),
            out_shape=jax.ShapeDtypeStruct((Mp, C), out_dtype),
            grid_spec=pltpu.PrefetchScalarGridSpec(
                num_scalar_prefetch=0,
                grid=(n_row_tiles,),
                in_specs=[
                    pl.BlockSpec((tm, C), lambda i: (i, 0)),    # x row tile
                    pl.BlockSpec((C, Hp), lambda i: (0, 0)),    # W1, fetched once
                    pl.BlockSpec((1, Hp), lambda i: (0, 0)),    # b1
                    pl.BlockSpec((Hp, C), lambda i: (0, 0)),    # W2, fetched once
                    pl.BlockSpec((1, C), lambda i: (0, 0)),     # b2
                ],
                out_specs=pl.BlockSpec((tm, C), lambda i: (i, 0)),
            ),
            compiler_params=pltpu.CompilerParams(
                dimension_semantics=("parallel",),
                vmem_limit_bytes=int(vmem_limit),
            ),
            cost_estimate=cost,
        )(x2, w1b, b1r, w2b, b2r)
    else:
        n_sub = th // sub_stream
        if wbuf != 2:
            w1_spec = pl.BlockSpec((C, th), lambda i, k: (0, k),
                                   pipeline_mode=pl.Buffered(wbuf))
            w2_spec = pl.BlockSpec((th, C), lambda i, k: (k, 0),
                                   pipeline_mode=pl.Buffered(wbuf))
        else:
            w1_spec = pl.BlockSpec((C, th), lambda i, k: (0, k))
            w2_spec = pl.BlockSpec((th, C), lambda i, k: (k, 0))
        out = pl.pallas_call(
            _make_stream_kernel(n_sub, sub_stream),
            out_shape=jax.ShapeDtypeStruct((Mp, C), out_dtype),
            grid_spec=pltpu.PrefetchScalarGridSpec(
                num_scalar_prefetch=0,
                grid=(n_row_tiles, Hp // th),
                in_specs=[
                    pl.BlockSpec((tm, C), lambda i, k: (i, 0)),  # x row tile
                    w1_spec,                                     # W1 hidden chunk
                    pl.BlockSpec((1, th), lambda i, k: (0, k)),  # b1 chunk
                    w2_spec,                                     # W2 hidden chunk
                    pl.BlockSpec((1, C), lambda i, k: (0, 0)),   # b2 (constant)
                ],
                out_specs=pl.BlockSpec((tm, C), lambda i, k: (i, 0)),
                scratch_shapes=[pltpu.VMEM((tm, C), jnp.float32)],
            ),
            compiler_params=pltpu.CompilerParams(
                dimension_semantics=("parallel", "arbitrary"),
                vmem_limit_bytes=int(vmem_limit),
            ),
            cost_estimate=cost,
        )(x2, w1b, b1r, w2b, b2r)

    if Mp != M:
        out = out[:M]
    return out.reshape(B, T, C)


def _torch_like_linear_init(key, fan_in, fan_out, dtype=jnp.float32):
    # PyTorch nn.Linear default: U(-1/sqrt(fan_in), 1/sqrt(fan_in)) for W and b.
    kw, kb = jax.random.split(key)
    bound = 1.0 / (fan_in ** 0.5)
    # stored as (in, out) so the kernel does x @ W
    w = jax.random.uniform(kw, (fan_in, fan_out), dtype, -bound, bound)
    b = jax.random.uniform(kb, (fan_out,), dtype, -bound, bound)
    return w, b


def feedforward_ref(x, w1, b1, w2, b2):
    # Reference with matching numerics: bf16 matmul inputs, f32 accumulate/epilogue.
    xb = x.astype(jnp.bfloat16).astype(jnp.float32)
    w1b = w1.astype(jnp.bfloat16).astype(jnp.float32)
    w2b = w2.astype(jnp.bfloat16).astype(jnp.float32)
    h = jnp.maximum(xb @ w1b + b1, 0.0)
    hb = h.astype(jnp.bfloat16).astype(jnp.float32)
    return hb @ w2b + b2


if __name__ == "__main__":
    n_embd = 128
    hidden = 4 * n_embd
    B, T = 2, 8

    key = jax.random.PRNGKey(0)
    kx, k1, k2 = jax.random.split(key, 3)

    x = jax.random.normal(kx, (B, T, n_embd), jnp.float32)
    w1, b1 = _torch_like_linear_init(k1, n_embd, hidden)
    w2, b2 = _torch_like_linear_init(k2, hidden, n_embd)

    out = feedforward_pallas(x, w1, b1, w2, b2)
    out = jax.block_until_ready(out)

    ref = feedforward_ref(x, w1, b1, w2, b2)
    assert out.shape == (B, T, n_embd)
    assert jnp.allclose(out, ref, atol=2e-2, rtol=2e-2), "pallas output mismatch vs reference"

    print("KERNEL_OK")
</pallas_src>

<mosaic_0001>
module attributes {stable_mosaic.version = 11 : i64} {
  func.func @kernel(%arg0: i32, %arg1: memref<8x128xbf16, #tpu.memory_space<vmem>>, %arg2: memref<128x512xbf16, #tpu.memory_space<vmem>>, %arg3: memref<1x512xf32, #tpu.memory_space<vmem>>, %arg4: memref<512x128xbf16, #tpu.memory_space<vmem>>, %arg5: memref<1x128xf32, #tpu.memory_space<vmem>>, %arg6: memref<8x128xf32, #tpu.memory_space<vmem>>) attributes {dimension_semantics = [#tpu.dimension_semantics<parallel>], iteration_bounds = array<i64: 2>, scalar_prefetch = 0 : i64, scratch_operands = 0 : i64, tpu.core_type = #tpu.core_type<tc>, window_params = [{transform_indices = @transform_0, window_bounds = array<i64: 8, 128>}, {pipeline_mode = #tpu.pipeline_mode<synchronous>, transform_indices = @transform_1, window_bounds = array<i64: 128, 512>}, {pipeline_mode = #tpu.pipeline_mode<synchronous>, transform_indices = @transform_2, window_bounds = array<i64: 1, 512>}, {pipeline_mode = #tpu.pipeline_mode<synchronous>, transform_indices = @transform_3, window_bounds = array<i64: 512, 128>}, {pipeline_mode = #tpu.pipeline_mode<synchronous>, transform_indices = @transform_4, window_bounds = array<i64: 1, 128>}, {transform_indices = @transform_5, window_bounds = array<i64: 8, 128>}]} {
    %c0 = arith.constant 0 : index
    %c0_0 = arith.constant 0 : index
    %0 = vector.load %arg1[%c0, %c0_0] : memref<8x128xbf16, #tpu.memory_space<vmem>>, vector<8x128xbf16>
    %cst = arith.constant 0.000000e+00 : f32
    %1 = vector.broadcast %cst : f32 to vector<8x128xf32>
    %c0_i32 = arith.constant 0 : i32
    %c256_i32 = arith.constant 256 : i32
    %2 = arith.muli %c0_i32, %c256_i32 : i32
    %3 = tpu.assume_multiple %2, 256 : i32
    %c0_1 = arith.constant 0 : index
    %4 = arith.index_cast %3 : i32 to index
    %5 = vector.load %arg2[%c0_1, %4] : memref<128x512xbf16, #tpu.memory_space<vmem>>, vector<128x256xbf16>
    %cst_2 = arith.constant dense<0.000000e+00> : vector<8x256xf32>
    %6 = tpu.matmul %0, %5, %cst_2 {dimension_numbers = #tpu.dot_dimension_numbers<[1], [0], [0], [1], [0, 0, 1, 1], [], []>} : vector<8x128xbf16>, vector<128x256xbf16>, vector<8x256xf32> -> vector<8x256xf32>
    %c0_3 = arith.constant 0 : index
    %7 = arith.index_cast %3 : i32 to index
    %8 = vector.load %arg3[%c0_3, %7] : memref<1x512xf32, #tpu.memory_space<vmem>>, vector<1x256xf32>
    %9 = vector.broadcast %8 : vector<1x256xf32> to vector<8x256xf32>
    %10 = arith.addf %6, %9 : vector<8x256xf32>
    %cst_4 = arith.constant 0.000000e+00 : f32
    %11 = vector.broadcast %cst_4 : f32 to vector<8x256xf32>
    %12 = arith.maximumf %10, %11 : vector<8x256xf32>
    %13 = arith.truncf %12 : vector<8x256xf32> to vector<8x256xbf16>
    %14 = arith.index_cast %3 : i32 to index
    %c0_5 = arith.constant 0 : index
    %15 = vector.load %arg4[%14, %c0_5] : memref<512x128xbf16, #tpu.memory_space<vmem>>, vector<256x128xbf16>
    %cst_6 = arith.constant dense<0.000000e+00> : vector<8x128xf32>
    %16 = tpu.matmul %13, %15, %cst_6 {dimension_numbers = #tpu.dot_dimension_numbers<[1], [0], [0], [1], [0, 0, 1, 1], [], []>} : vector<8x256xbf16>, vector<256x128xbf16>, vector<8x128xf32> -> vector<8x128xf32>
    %17 = arith.addf %1, %16 : vector<8x128xf32>
    %c1_i32 = arith.constant 1 : i32
    %c256_i32_7 = arith.constant 256 : i32
    %18 = arith.muli %c1_i32, %c256_i32_7 : i32
    %19 = tpu.assume_multiple %18, 256 : i32
    %c0_8 = arith.constant 0 : index
    %20 = arith.index_cast %19 : i32 to index
    %21 = vector.load %arg2[%c0_8, %20] : memref<128x512xbf16, #tpu.memory_space<vmem>>, vector<128x256xbf16>
    %cst_9 = arith.constant dense<0.000000e+00> : vector<8x256xf32>
    %22 = tpu.matmul %0, %21, %cst_9 {dimension_numbers = #tpu.dot_dimension_numbers<[1], [0], [0], [1], [0, 0, 1, 1], [], []>} : vector<8x128xbf16>, vector<128x256xbf16>, vector<8x256xf32> -> vector<8x256xf32>
    %c0_10 = arith.constant 0 : index
    %23 = arith.index_cast %19 : i32 to index
    %24 = vector.load %arg3[%c0_10, %23] : memref<1x512xf32, #tpu.memory_space<vmem>>, vector<1x256xf32>
    %25 = vector.broadcast %24 : vector<1x256xf32> to vector<8x256xf32>
    %26 = arith.addf %22, %25 : vector<8x256xf32>
    %cst_11 = arith.constant 0.000000e+00 : f32
    %27 = vector.broadcast %cst_11 : f32 to vector<8x256xf32>
    %28 = arith.maximumf %26, %27 : vector<8x256xf32>
    %29 = arith.truncf %28 : vector<8x256xf32> to vector<8x256xbf16>
    %30 = arith.index_cast %19 : i32 to index
    %c0_12 = arith.constant 0 : index
    %31 = vector.load %arg4[%30, %c0_12] : memref<512x128xbf16, #tpu.memory_space<vmem>>, vector<256x128xbf16>
    %cst_13 = arith.constant dense<0.000000e+00> : vector<8x128xf32>
    %32 = tpu.matmul %29, %31, %cst_13 {dimension_numbers = #tpu.dot_dimension_numbers<[1], [0], [0], [1], [0, 0, 1, 1], [], []>} : vector<8x256xbf16>, vector<256x128xbf16>, vector<8x128xf32> -> vector<8x128xf32>
    %33 = arith.addf %17, %32 : vector<8x128xf32>
    %c2_i32 = arith.constant 2 : i32
    %c0_14 = arith.constant 0 : index
    %c0_15 = arith.constant 0 : index
    %34 = vector.load %arg5[%c0_14, %c0_15] : memref<1x128xf32, #tpu.memory_space<vmem>>, vector<1x128xf32>
    %35 = vector.broadcast %34 : vector<1x128xf32> to vector<8x128xf32>
    %36 = arith.addf %33, %35 : vector<8x128xf32>
    %c0_16 = arith.constant 0 : index
    %c0_17 = arith.constant 0 : index
    %37 = vector.load %arg6[%c0_16, %c0_17] : memref<8x128xf32, #tpu.memory_space<vmem>>, vector<8x128xf32>
    tpu.vector_store %arg6[%c0_16, %c0_17], %36 {strides = array<i32>} : memref<8x128xf32, #tpu.memory_space<vmem>>, vector<8x128xf32>,
    return
  }
  func.func @transform_0(%arg0: i32) -> (i32, i32) {
    %c0_i32 = arith.constant 0 : i32
    %c0_i32_0 = arith.constant 0 : i32
    return %arg0, %c0_i32 : i32, i32
  }
  func.func @transform_1(%arg0: i32) -> (i32, i32) {
    %c0_i32 = arith.constant 0 : i32
    %c0_i32_0 = arith.constant 0 : i32
    %c0_i32_1 = arith.constant 0 : i32
    return %c0_i32, %c0_i32_0 : i32, i32
  }
  func.func @transform_2(%arg0: i32) -> (i32, i32) {
    %c0_i32 = arith.constant 0 : i32
    %c0_i32_0 = arith.constant 0 : i32
    %c0_i32_1 = arith.constant 0 : i32
    return %c0_i32, %c0_i32_0 : i32, i32
  }
  func.func @transform_3(%arg0: i32) -> (i32, i32) {
    %c0_i32 = arith.constant 0 : i32
    %c0_i32_0 = arith.constant 0 : i32
    %c0_i32_1 = arith.constant 0 : i32
    return %c0_i32, %c0_i32_0 : i32, i32
  }
  func.func @transform_4(%arg0: i32) -> (i32, i32) {
    %c0_i32 = arith.constant 0 : i32
    %c0_i32_0 = arith.constant 0 : i32
    %c0_i32_1 = arith.constant 0 : i32
    return %c0_i32, %c0_i32_0 : i32, i32
  }
  func.func @transform_5(%arg0: i32) -> (i32, i32) {
    %c0_i32 = arith.constant 0 : i32
    %c0_i32_0 = arith.constant 0 : i32
    return %arg0, %c0_i32 : i32, i32
  }
}

</mosaic_0001>

<llo_original>
// kernel: tpu_custom_call.1
$region0: #{tpu_custom_call.1}
  #allocation0 [shape = 'u32[]', space=smem, size = 0x4, offset = 0x4, fixed_abs, tag = 'smem constant byte address 0x4 - core index']
  #allocation1 [shape = 'u32[144,128]{1,0:T(1,128)}', space=vmem, size = 0x12000, scoped, tag = 'internal scratch']
  %s0 = inlined_call_operand.hbm [shape: bf16[16,128], index: 0, kind: input, shape index: {}]
  %s1 = inlined_call_operand.hbm [shape: bf16[128,512], index: 1, kind: input, shape index: {}]
  %s2 = inlined_call_operand.hbm [shape: f32[1,512], index: 2, kind: input, shape index: {}]
  %s3 = inlined_call_operand.hbm [shape: bf16[512,128], index: 3, kind: input, shape index: {}]
  %s4 = inlined_call_operand.vmem [shape: f32[1,128], index: 4, kind: input, shape index: {}]
  %s5 = inlined_call_operand.hbm [shape: f32[16,128], index: 5, kind: output, shape index: {}]
  %s6 = sld [smem:[#allocation0]]
  $region69: #{tpu_custom_call.1} parent=0
    _
  %s8 = ssub.s32 1, %s6
  %s9 = scalar_select 0, %s8, %s6
  $region1: #{tpu_custom_call.1} parent=0
    #allocation2 [shape = 'u8[4096]{0}', space=vmem, size = 0x1000, scoped, tag = 'input window, operand 0']
    #allocation3 [shape = 's32[2]{0}', space=sflag, size = 0x8, scoped, tag = 'scoped memory for tpu_custom_call.1']
    #allocation4 [shape = 's32[2]{0}', space=sflag, size = 0x8, scoped, tag = 'scoped memory for tpu_custom_call.1']
    #allocation5 [shape = 'u8[131072]{0}', space=vmem, size = 0x20000, scoped, tag = 'input window, operand 1, single buffered']
    #allocation6 [shape = 's32[1]{0}', space=sflag, size = 0x4, scoped, tag = 'scoped memory for tpu_custom_call.1']
    #allocation7 [shape = 'u8[2048]{0}', space=vmem, size = 0x800, scoped, tag = 'input window, operand 2, single buffered']
    #allocation8 [shape = 'u8[131072]{0}', space=vmem, size = 0x20000, scoped, tag = 'input window, operand 3, single buffered']
    #allocation9 [shape = 's32[1]{0}', space=sflag, size = 0x4, scoped, tag = 'scoped memory for tpu_custom_call.1']
    #allocation10 [shape = 'u8[8192]{0}', space=vmem, size = 0x2000, scoped, tag = 'output window, operand 0']
    %10 = vsyncpa [#allocation3], 0
    %s11 = scalar_lea.sflag [#allocation3], 1
    %12 = vsyncpa %s11, 0
    %13 = vsyncpa [#allocation6], 0
    %14 = vsyncpa [#allocation9], 0
    %15 = vsyncpa [#allocation4], 0
    %s16 = scalar_lea.sflag [#allocation4], 1
    %17 = vsyncpa %s16, 0
    loop: start=0, step=1, limit=4
    $region2: #{tpu_custom_call.1} parent=1 // loop_pre_header
      _
    $region3: #{tpu_custom_call.1} parent=1 // loop_header
      %s19 = sphi 0, %s23
      %p20 = scmp.ge.s32.totalorder %s19, 4
      %s29 = sphi 0, %s31
      %s32 = sphi 0, %s29
      %s33 = sphi 0, %s32
      %s49 = sphi 0, %s33
      %s53 = sphi 0, %s53
      %s55 = sphi 0, %s53
      %s56 = sphi 0, %s55
      %s70 = sphi 0, %s56
      %s74 = sphi 0, %s74
      %s76 = sphi 0, %s74
      %s77 = sphi 0, %s76
      %s91 = sphi 0, %s77
      %s95 = sphi 0, %s95
      %s97 = sphi 0, %s95
      %s98 = sphi 0, %s97
      %s112 = sphi 0, %s98
      %s116 = sphi 0, %s116
      %s118 = sphi 0, %s116
      %s119 = sphi 0, %s118
      %s133 = sphi 0, %s119
      %s139 = sphi 0, %s141
      %s142 = sphi 0, %s139
      %s143 = sphi 0, %s142
      %s159 = sphi 0, %s143
    $region4: #{tpu_custom_call.1} parent=1 // loop_header_branch
      %22 = sbr.rel (%p20) target = $region8
    $region5: #{tpu_custom_call.1} parent=1 // loop_body
      %s24 = ssub.s32 %s19, 1
      %s25 = ssub.s32 %s19, 2
      %s26 = sadd.s32 %s19, 1
      %s27 = ssub.s32 %s19, %s26
      %p28 = scmp.eq.s32.totalorder %s27, 0
      %s30 = sadd.s32 %s29, 1
      %s31 = scalar_select %p28, %s29, %s30
      %p34 = pneg %p28
      %p35 = scmp.eq.s32.totalorder %s19, 1
      %p36 = por %p34, %p35
      %p37 = scmp.ne.s32.totalorder %s29, %s32
      %p38 = scmp.eq.s32.totalorder %s19, 0
      %p39 = por %p37, %p38
      %p40 = scmp.ne.s32.totalorder %s29, %s32
      %p41 = scmp.eq.s32.totalorder %s24, 1
      %p42 = por %p40, %p41
      %p43 = scmp.ne.s32.totalorder %s32, %s33
      %p44 = scmp.eq.s32.totalorder %s24, 0
      %p45 = por %p43, %p44
      %p46 = scmp.ne.s32.totalorder %s32, %s33
      %p47 = scmp.eq.s32.totalorder %s25, 1
      %p48 = por %p46, %p47
      %p50 = scmp.ne.s32.totalorder %s33, %s49
      %p51 = scmp.eq.s32.totalorder %s25, 0
      %p52 = por %p50, %p51
      %s54 = sadd.s32 %s53, 1
      %p57 = scmp.eq.s32.totalorder %s19, 1
      %p58 = scmp.ne.s32.totalorder %s53, %s55
      %p59 = scmp.eq.s32.totalorder %s19, 0
      %p60 = por %p58, %p59
      %p61 = scmp.ne.s32.totalorder %s53, %s55
      %p62 = scmp.eq.s32.totalorder %s24, 1
      %p63 = por %p61, %p62
      %p64 = scmp.ne.s32.totalorder %s55, %s56
      %p65 = scmp.eq.s32.totalorder %s24, 0
      %p66 = por %p64, %p65
      %p67 = scmp.ne.s32.totalorder %s55, %s56
      %p68 = scmp.eq.s32.totalorder %s25, 1
      %p69 = por %p67, %p68
      %p71 = scmp.ne.s32.totalorder %s56, %s70
      %p72 = scmp.eq.s32.totalorder %s25, 0
      %p73 = por %p71, %p72
      %s75 = sadd.s32 %s74, 1
      %p78 = scmp.eq.s32.totalorder %s19, 1
      %p79 = scmp.ne.s32.totalorder %s74, %s76
      %p80 = scmp.eq.s32.totalorder %s19, 0
      %p81 = por %p79, %p80
      %p82 = scmp.ne.s32.totalorder %s74, %s76
      %p83 = scmp.eq.s32.totalorder %s24, 1
      %p84 = por %p82, %p83
      %p85 = scmp.ne.s32.totalorder %s76, %s77
      %p86 = scmp.eq.s32.totalorder %s24, 0
      %p87 = por %p85, %p86
      %p88 = scmp.ne.s32.totalorder %s76, %s77
      %p89 = scmp.eq.s32.totalorder %s25, 1
      %p90 = por %p88, %p89
      %p92 = scmp.ne.s32.totalorder %s77, %s91
      %p93 = scmp.eq.s32.totalorder %s25, 0
      %p94 = por %p92, %p93
      %s96 = sadd.s32 %s95, 1
      %p99 = scmp.eq.s32.totalorder %s19, 1
      %p100 = scmp.ne.s32.totalorder %s95, %s97
      %p101 = scmp.eq.s32.totalorder %s19, 0
      %p102 = por %p100, %p101
      %p103 = scmp.ne.s32.totalorder %s95, %s97
      %p104 = scmp.eq.s32.totalorder %s24, 1
      %p105 = por %p103, %p104
      %p106 = scmp.ne.s32.totalorder %s97, %s98
      %p107 = scmp.eq.s32.totalorder %s24, 0
      %p108 = por %p106, %p107
      %p109 = scmp.ne.s32.totalorder %s97, %s98
      %p110 = scmp.eq.s32.totalorder %s25, 1
      %p111 = por %p109, %p110
      %p113 = scmp.ne.s32.totalorder %s98, %s112
      %p114 = scmp.eq.s32.totalorder %s25, 0
      %p115 = por %p113, %p114
      %s117 = sadd.s32 %s116, 1
      %p120 = scmp.eq.s32.totalorder %s19, 1
      %p121 = scmp.ne.s32.totalorder %s116, %s118
      %p122 = scmp.eq.s32.totalorder %s19, 0
      %p123 = por %p121, %p122
      %p124 = scmp.ne.s32.totalorder %s116, %s118
      %p125 = scmp.eq.s32.totalorder %s24, 1
      %p126 = por %p124, %p125
      %p127 = scmp.ne.s32.totalorder %s118, %s119
      %p128 = scmp.eq.s32.totalorder %s24, 0
      %p129 = por %p127, %p128
      %p130 = scmp.ne.s32.totalorder %s118, %s119
      %p131 = scmp.eq.s32.totalorder %s25, 1
      %p132 = por %p130, %p131
      %p134 = scmp.ne.s32.totalorder %s119, %s133
      %p135 = scmp.eq.s32.totalorder %s25, 0
      %p136 = por %p134, %p135
      %s137 = ssub.s32 %s19, %s26
      %p138 = scmp.eq.s32.totalorder %s137, 0
      %s140 = sadd.s32 %s139, 1
      %s141 = scalar_select %p138, %s139, %s140
      %p144 = pneg %p138
      %p145 = scmp.eq.s32.totalorder %s19, 1
      %p146 = por %p144, %p145
      %p147 = scmp.ne.s32.totalorder %s139, %s142
      %p148 = scmp.eq.s32.totalorder %s19, 0
      %p149 = por %p147, %p148
      %p150 = scmp.ne.s32.totalorder %s139, %s142
      %p151 = scmp.eq.s32.totalorder %s24, 1
      %p152 = por %p150, %p151
      %p153 = scmp.ne.s32.totalorder %s142, %s143
      %p154 = scmp.eq.s32.totalorder %s24, 0
      %p155 = por %p153, %p154
      %p156 = scmp.ne.s32.totalorder %s142, %s143
      %p157 = scmp.eq.s32.totalorder %s25, 1
      %p158 = por %p156, %p157
      %p160 = scmp.ne.s32.totalorder %s143, %s159
      %p161 = scmp.eq.s32.totalorder %s25, 0
      %p162 = por %p160, %p161
      %p163 = scmp.le.s32.totalorder 1, %s19
      %p164 = scmp.lt.s32.totalorder %s19, 3
      %p165 = pnand %p163, %p164
      %p166 = pneg %p165
      // Predicated region
      $region9: #{tpu_custom_call.1} parent=5 // pred_check
        _
      $region10: #{tpu_custom_call.1} parent=5 // pred_check_branch
        %168 = sbr.rel (%p165) target = $region12
      $region11: #{tpu_custom_call.1} parent=5 // pred_region
        %s169 = ssub.s32 %s19, 1
        // Predicated region
        $region13: #{tpu_custom_call.1} parent=11 // pred_check
          %p170 = pneg %p66
        $region14: #{tpu_custom_call.1} parent=11 // pred_check_branch
          %172 = sbr.rel (%p170) target = $region16
        $region15: #{tpu_custom_call.1} parent=11 // pred_region
          %s174 = ssub.s32 4096, 4096
          %175 = vsyncadd [#allocation6], %s174
          %s176 = sshll.u32 [#allocation5], 4
          %s177 = int_to_ptr.vmem [resolvable:$true] %s176
          %182 = dma.hbm_to_vmem [thread:$0]  %s1, 4096, %s177, [#allocation6], 256, 256, 16
        $region16: #{tpu_custom_call.1} parent=11 // pred_fallthru
          _
        // Predicated region
        $region17: #{tpu_custom_call.1} parent=11 // pred_check
          %p183 = pneg %p87
        $region18: #{tpu_custom_call.1} parent=11 // pred_check_branch
          %185 = sbr.rel (%p183) target = $region20
        $region19: #{tpu_custom_call.1} parent=11 // pred_region
          %s187 = ssub.s32 64, 64
          %188 = vsyncadd [#allocation6], %s187
          %s190 = sshll.u32 [#allocation7], 4
          %s191 = int_to_ptr.vmem [resolvable:$true] %s190
          %193 = dma.hbm_to_vmem [thread:$0]  %s2, 64, %s191, [#allocation6]
        $region20: #{tpu_custom_call.1} parent=11 // pred_fallthru
          _
        // Predicated region
        $region21: #{tpu_custom_call.1} parent=11 // pred_check
          %p194 = pneg %p108
        $region22: #{tpu_custom_call.1} parent=11 // pred_check_branch
          %196 = sbr.rel (%p194) target = $region24
        $region23: #{tpu_custom_call.1} parent=11 // pred_region
          %s198 = ssub.s32 4096, 4096
          %199 = vsyncadd [#allocation9], %s198
          %s200 = sshll.u32 [#allocation8], 4
          %s201 = int_to_ptr.vmem [resolvable:$true] %s200
          %206 = dma.hbm_to_vmem [thread:$0]  %s3, 4096, %s201, [#allocation9], 64, 64, 4
        $region24: #{tpu_custom_call.1} parent=11 // pred_fallthru
          _
        // Predicated region
        $region25: #{tpu_custom_call.1} parent=11 // pred_check
          %p207 = pneg %p129
        $region26: #{tpu_custom_call.1} parent=11 // pred_check_branch
          %209 = sbr.rel (%p207) target = $region28
        $region27: #{tpu_custom_call.1} parent=11 // pred_region
          _
        $region28: #{tpu_custom_call.1} parent=11 // pred_fallthru
          _
      $region12: #{tpu_custom_call.1} parent=5 // pred_fallthru
        _
      %p210 = scmp.lt.s32.totalorder %s19, 2
      // Predicated region
      $region29: #{tpu_custom_call.1} parent=5 // pred_check
        %p211 = pneg %p210
      $region30: #{tpu_custom_call.1} parent=5 // pred_check_branch
        %213 = sbr.rel (%p211) target = $region32
      $region31: #{tpu_custom_call.1} parent=5 // pred_region
        // Predicated region
        $region33: #{tpu_custom_call.1} parent=31 // pred_check
          %p214 = pneg %p39
        $region34: #{tpu_custom_call.1} parent=31 // pred_check_branch
          %216 = sbr.rel (%p214) target = $region36
        $region35: #{tpu_custom_call.1} parent=31 // pred_region
          %s217 = sand.u32 %s29, 1
          %s218 = scalar_lea.sflag [#allocation3], %s217
          %s219 = sand.u32 %s29, 1
          %s220 = smul.addr %s219, 4
          %s221 = scalar_lea.vmem [#allocation2], %s220
          %s223 = ssub.s32 64, 64
          %224 = vsyncadd %s218, %s223
          %s225 = smul.addr %s19, 64
          %s226 = scalar_lea.hbm %s0, %s225
          %s228 = sshll.u32 %s221, 4
          %s229 = int_to_ptr.vmem [resolvable:$true] %s228
          %231 = dma.hbm_to_vmem [thread:$0]  %s226, 64, %s229, %s218
        $region36: #{tpu_custom_call.1} parent=31 // pred_fallthru
          _
      $region32: #{tpu_custom_call.1} parent=5 // pred_fallthru
        _
      %p232 = scmp.le.s32.totalorder 1, %s19
      %p233 = scmp.lt.s32.totalorder %s19, 3
      %p234 = pnand %p232, %p233
      %p235 = pneg %p234
      // Predicated region
      $region37: #{tpu_custom_call.1} parent=5 // pred_check
        _
      $region38: #{tpu_custom_call.1} parent=5 // pred_check_branch
        %237 = sbr.rel (%p234) target = $region40
      $region39: #{tpu_custom_call.1} parent=5 // pred_region
        %s238 = ssub.s32 %s19, 1
        %s239 = sand.u32 %s32, 1
        %s240 = scalar_lea.sflag [#allocation3], %s239
        %s241 = sand.u32 %s32, 1
        %s242 = smul.addr %s241, 4
        %s243 = scalar_lea.vmem [#allocation2], %s242
        // Predicated region
        $region41: #{tpu_custom_call.1} parent=39 // pred_check
          %p244 = pneg %p45
        $region42: #{tpu_custom_call.1} parent=39 // pred_check_branch
          %246 = sbr.rel (%p244) target = $region44
        $region43: #{tpu_custom_call.1} parent=39 // pred_region
          %247 = dma.done %s240, 64
        $region44: #{tpu_custom_call.1} parent=39 // pred_fallthru
          _
        // Predicated region
        $region45: #{tpu_custom_call.1} parent=39 // pred_check
          %p248 = pneg %p66
        $region46: #{tpu_custom_call.1} parent=39 // pred_check_branch
          %250 = sbr.rel (%p248) target = $region48
        $region47: #{tpu_custom_call.1} parent=39 // pred_region
          %251 = dma.done [#allocation6], 4096
        $region48: #{tpu_custom_call.1} parent=39 // pred_fallthru
          _
        // Predicated region
        $region49: #{tpu_custom_call.1} parent=39 // pred_check
          %p252 = pneg %p87
        $region50: #{tpu_custom_call.1} parent=39 // pred_check_branch
          %254 = sbr.rel (%p252) target = $region52
        $region51: #{tpu_custom_call.1} parent=39 // pred_region
          %255 = dma.done [#allocation6], 64
        $region52: #{tpu_custom_call.1} parent=39 // pred_fallthru
          _
        // Predicated region
        $region53: #{tpu_custom_call.1} parent=39 // pred_check
          %p256 = pneg %p108
        $region54: #{tpu_custom_call.1} parent=39 // pred_check_branch
          %258 = sbr.rel (%p256) target = $region56
        $region55: #{tpu_custom_call.1} parent=39 // pred_region
          %259 = dma.done [#allocation9], 4096
        $region56: #{tpu_custom_call.1} parent=39 // pred_fallthru
          _
        %s260 = sand.u32 %s32, 1
        %s261 = scalar_lea.sflag [#allocation3], %s260
        %s262 = sand.u32 %s32, 1
        %s263 = smul.addr %s262, 4
        %s264 = scalar_lea.vmem [#allocation2], %s263
        %p265 = pneg %p45
        %p266 = pneg %p42
        %p267 = pneg %p66
        %p268 = pneg %p63
        %p269 = pneg %p87
        %p270 = pneg %p84
        %p271 = pneg %p108
        %p272 = pneg %p105
        %p273 = pneg %p129
        %p274 = pneg %p126
        %p275 = pneg %p155
        %p276 = pneg %p152
        %s277 = sand.u32 %s142, 1
        %s278 = scalar_lea.sflag [#allocation4], %s277
        %s279 = sand.u32 %s142, 1
        %s280 = smul.addr %s279, 8
        %s281 = scalar_lea.vmem [#allocation10], %s280
        %v283 = vld [vmem:[%s243] sm:$0xf]
        %v284 = vld [vmem:[#allocation5] sm:$0xff]
        %v285 = vld [vmem:[#allocation5 + $0x10] sm:$0xff]
        %v286 = vld [vmem:[#allocation5 + $0x20] sm:$0xff]
        %v287 = vld [vmem:[#allocation5 + $0x30] sm:$0xff]
        %v288 = vld [vmem:[#allocation5 + $0x40] sm:$0xff]
        %v289 = vld [vmem:[#allocation5 + $0x50] sm:$0xff]
        %v290 = vld [vmem:[#allocation5 + $0x60] sm:$0xff]
        %v291 = vld [vmem:[#allocation5 + $0x70] sm:$0xff]
        %v292 = vld [vmem:[#allocation5 + $0x80] sm:$0xff]
        %v293 = vld [vmem:[#allocation5 + $0x90] sm:$0xff]
        %v294 = vld [vmem:[#allocation5 + $0xa0] sm:$0xff]
        %v295 = vld [vmem:[#allocation5 + $0xb0] sm:$0xff]
        %v296 = vld [vmem:[#allocation5 + $0xc0] sm:$0xff]
        %v297 = vld [vmem:[#allocation5 + $0xd0] sm:$0xff]
        %v298 = vld [vmem:[#allocation5 + $0xe0] sm:$0xff]
        %v299 = vld [vmem:[#allocation5 + $0xf0] sm:$0xff]
        %v300 = vld [vmem:[#allocation7] sm:$0x3]
        %v302 = vlaneseq
        %v303 = vshrl.u32 %v302, 7
        %v304 = vsub.s32 0, %v303
        %v305 = vrot.slane %v300, %v304
        %v306 = vlaneseq
        %v307 = vshrl.u32 %v306, 7
        %v308 = vsub.s32 1, %v307
        %v309 = vrot.slane %v300, %v308
        %v328 = vunpack.c.l.b16 %v284
        %v329 = vunpack.c.h.b16 %v284
        %v330 = vunpack.c.l.b16 %v285
        %v331 = vunpack.c.h.b16 %v285
        %v332 = vunpack.c.l.b16 %v286
        %v333 = vunpack.c.h.b16 %v286
        %v334 = vunpack.c.l.b16 %v287
        %v335 = vunpack.c.h.b16 %v287
        %v336 = vunpack.c.l.b16 %v288
        %v337 = vunpack.c.h.b16 %v288
        %v338 = vunpack.c.l.b16 %v289
        %v339 = vunpack.c.h.b16 %v289
        %v340 = vunpack.c.l.b16 %v290
        %v341 = vunpack.c.h.b16 %v290
        %v342 = vunpack.c.l.b16 %v291
        %v343 = vunpack.c.h.b16 %v291
        %v344 = vunpack.c.l.b16 %v292
        %v345 = vunpack.c.h.b16 %v292
        %v346 = vunpack.c.l.b16 %v293
        %v347 = vunpack.c.h.b16 %v293
        %v348 = vunpack.c.l.b16 %v294
        %v349 = vunpack.c.h.b16 %v294
        %v350 = vunpack.c.l.b16 %v295
        %v351 = vunpack.c.h.b16 %v295
        %v352 = vunpack.c.l.b16 %v296
        %v353 = vunpack.c.h.b16 %v296
        %v354 = vunpack.c.l.b16 %v297
        %v355 = vunpack.c.h.b16 %v297
        %v356 = vunpack.c.l.b16 %v298
        %v357 = vunpack.c.h.b16 %v298
        %v358 = vunpack.c.l.b16 %v299
        %v359 = vunpack.c.h.b16 %v299
        %v360 = vpack.c.b16 %v330, %v328
        %v361 = vpack.c.b16 %v331, %v329
        %v362 = vpack.c.b16 %v334, %v332
        %v363 = vpack.c.b16 %v335, %v333
        %v364 = vpack.c.b16 %v338, %v336
        %v365 = vpack.c.b16 %v339, %v337
        %v366 = vpack.c.b16 %v342, %v340
        %v367 = vpack.c.b16 %v343, %v341
        %v368 = vpack.c.b16 %v346, %v344
        %v369 = vpack.c.b16 %v347, %v345
        %v370 = vpack.c.b16 %v350, %v348
        %v371 = vpack.c.b16 %v351, %v349
        %v372 = vpack.c.b16 %v354, %v352
        %v373 = vpack.c.b16 %v355, %v353
        %v374 = vpack.c.b16 %v358, %v356
        %v375 = vpack.c.b16 %v359, %v357
        %392 = vmatprep.subr.bf16.mxu0 %v375
        %393 = vmatpush1.bf16.msra.mxu0 %v374
        %394 = vmatprep.subr.bf16.mxu0 %v373
        %395 = vmatpush1.bf16.msra.mxu0 %v372
        %396 = vmatprep.subr.bf16.mxu0 %v371
        %397 = vmatpush1.bf16.msra.mxu0 %v370
        %398 = vmatprep.subr.bf16.mxu0 %v369
        %399 = vmatpush1.bf16.msra.mxu0 %v368
        %400 = vmatprep.subr.bf16.mxu0 %v367
        %401 = vmatpush1.bf16.msra.mxu0 %v366
        %402 = vmatprep.subr.bf16.mxu0 %v365
        %403 = vmatpush1.bf16.msra.mxu0 %v364
        %404 = vmatprep.subr.bf16.mxu0 %v363
        %405 = vmatpush1.bf16.msra.mxu0 %v362
        %406 = vmatprep.subr.bf16.mxu0 %v361
        %407 = vmatpush1.bf16.msra.mxu0 %v360
        %408 = vmatprep.subr.bf16.mxu0 0
        %409 = vmatpush2.bf16.msra.mxu0 0
        %410 = vmatprep.subr.bf16.mxu0 0
        %411 = vmatpush2.bf16.msra.mxu0 0
        %412 = vmatprep.subr.bf16.mxu0 0
        %413 = vmatpush2.bf16.msra.mxu0 0
        %414 = vmatprep.subr.bf16.mxu0 0
        %415 = vmatpush2.bf16.msra.mxu0 0
        %416 = vmatprep.subr.bf16.mxu0 0
        %417 = vmatpush2.bf16.msra.mxu0 0
        %418 = vmatprep.subr.bf16.mxu0 0
        %419 = vmatpush2.bf16.msra.mxu0 0
        %420 = vmatprep.subr.bf16.mxu0 0
        %421 = vmatpush2.bf16.msra.mxu0 0
        %422 = vmatprep.subr.bf16.mxu0 0
        %423 = vmatpush2.bf16.msra.mxu0 0
        %424 = vmatprep.mubr.bf16.mxu0 0
        %425 = vmatmul.mubr.bf16.gmra.mxu0 %v283
        %v426 = vpop.f32.mrf.mxu0
        %v427 = vadd.f32 %v305, %v426
        %v428 = vpop.f32.mrf.mxu0
        %v429 = vadd.f32 %v309, %v428
        %v430 = vpop.f32.mrf.mxu0
        %v431 = vpop.f32.mrf.mxu0
        %432 = vdwg.mxu0
        %v433 = vmax.f32 %v427, 0.0
        %v434 = vmax.f32 %v429, 0.0
        %v435 = vpack.c.bf16 %v433, %v433
        %v436 = vpack.c.bf16 %v434, %v434
        %v437 = vld [vmem:[#allocation8] sm:$0xf]
        %v438 = vld [vmem:[#allocation8 + $0x4] sm:$0xf]
        %v439 = vld [vmem:[#allocation8 + $0x8] sm:$0xf]
        %v440 = vld [vmem:[#allocation8 + $0xc] sm:$0xf]
        %v441 = vld [vmem:[#allocation8 + $0x10] sm:$0xf]
        %v442 = vld [vmem:[#allocation8 + $0x14] sm:$0xf]
        %v443 = vld [vmem:[#allocation8 + $0x18] sm:$0xf]
        %v444 = vld [vmem:[#allocation8 + $0x1c] sm:$0xf]
        %v445 = vld [vmem:[#allocation8 + $0x20] sm:$0xf]
        %v446 = vld [vmem:[#allocation8 + $0x24] sm:$0xf]
        %v447 = vld [vmem:[#allocation8 + $0x28] sm:$0xf]
        %v448 = vld [vmem:[#allocation8 + $0x2c] sm:$0xf]
        %v449 = vld [vmem:[#allocation8 + $0x30] sm:$0xf]
        %v450 = vld [vmem:[#allocation8 + $0x34] sm:$0xf]
        %v451 = vld [vmem:[#allocation8 + $0x38] sm:$0xf]
        %v452 = vld [vmem:[#allocation8 + $0x3c] sm:$0xf]
        %v453 = vld [vmem:[#allocation8 + $0x40] sm:$0xf]
        %v454 = vld [vmem:[#allocation8 + $0x44] sm:$0xf]
        %v455 = vld [vmem:[#allocation8 + $0x48] sm:$0xf]
        %v456 = vld [vmem:[#allocation8 + $0x4c] sm:$0xf]
        %v457 = vld [vmem:[#allocation8 + $0x50] sm:$0xf]
        %v458 = vld [vmem:[#allocation8 + $0x54] sm:$0xf]
        %v459 = vld [vmem:[#allocation8 + $0x58] sm:$0xf]
        %v460 = vld [vmem:[#allocation8 + $0x5c] sm:$0xf]
        %v461 = vld [vmem:[#allocation8 + $0x60] sm:$0xf]
        %v462 = vld [vmem:[#allocation8 + $0x64] sm:$0xf]
        %v463 = vld [vmem:[#allocation8 + $0x68] sm:$0xf]
        %v464 = vld [vmem:[#allocation8 + $0x6c] sm:$0xf]
        %v465 = vld [vmem:[#allocation8 + $0x70] sm:$0xf]
        %v466 = vld [vmem:[#allocation8 + $0x74] sm:$0xf]
        %v467 = vld [vmem:[#allocation8 + $0x78] sm:$0xf]
        %v468 = vld [vmem:[#allocation8 + $0x7c] sm:$0xf]
        %s469 = scalar_lea.vmem [#allocation5], 8
        %v470 = vld [vmem:[%s469] sm:$0xff]
        %v471 = vld [vmem:[%s469 + $0x10] sm:$0xff]
        %v472 = vld [vmem:[%s469 + $0x20] sm:$0xff]
        %v473 = vld [vmem:[%s469 + $0x30] sm:$0xff]
        %v474 = vld [vmem:[%s469 + $0x40] sm:$0xff]
        %v475 = vld [vmem:[%s469 + $0x50] sm:$0xff]
        %v476 = vld [vmem:[%s469 + $0x60] sm:$0xff]
        %v477 = vld [vmem:[%s469 + $0x70] sm:$0xff]
        %v478 = vld [vmem:[%s469 + $0x80] sm:$0xff]
        %v479 = vld [vmem:[%s469 + $0x90] sm:$0xff]
        %v480 = vld [vmem:[%s469 + $0xa0] sm:$0xff]
        %v481 = vld [vmem:[%s469 + $0xb0] sm:$0xff]
        %v482 = vld [vmem:[%s469 + $0xc0] sm:$0xff]
        %v483 = vld [vmem:[%s469 + $0xd0] sm:$0xff]
        %v484 = vld [vmem:[%s469 + $0xe0] sm:$0xff]
        %v485 = vld [vmem:[%s469 + $0xf0] sm:$0xff]
        %s486 = scalar_lea.vmem [#allocation7], 2
        %v487 = vld [vmem:[%s486] sm:$0x3]
        %v489 = vlaneseq
        %v490 = vshrl.u32 %v489, 7
        %v491 = vsub.s32 0, %v490
        %v492 = vrot.slane %v487, %v491
        %v493 = vlaneseq
        %v494 = vshrl.u32 %v493, 7
        %v495 = vsub.s32 1, %v494
        %v496 = vrot.slane %v487, %v495
        %v515 = vunpack.c.l.b16 %v470
        %v516 = vunpack.c.h.b16 %v470
        %v517 = vunpack.c.l.b16 %v471
        %v518 = vunpack.c.h.b16 %v471
        %v519 = vunpack.c.l.b16 %v472
        %v520 = vunpack.c.h.b16 %v472
        %v521 = vunpack.c.l.b16 %v473
        %v522 = vunpack.c.h.b16 %v473
        %v523 = vunpack.c.l.b16 %v474
        %v524 = vunpack.c.h.b16 %v474
        %v525 = vunpack.c.l.b16 %v475
        %v526 = vunpack.c.h.b16 %v475
        %v527 = vunpack.c.l.b16 %v476
        %v528 = vunpack.c.h.b16 %v476
        %v529 = vunpack.c.l.b16 %v477
        %v530 = vunpack.c.h.b16 %v477
        %v531 = vunpack.c.l.b16 %v478
        %v532 = vunpack.c.h.b16 %v478
        %v533 = vunpack.c.l.b16 %v479
        %v534 = vunpack.c.h.b16 %v479
        %v535 = vunpack.c.l.b16 %v480
        %v536 = vunpack.c.h.b16 %v480
        %v537 = vunpack.c.l.b16 %v481
        %v538 = vunpack.c.h.b16 %v481
        %v539 = vunpack.c.l.b16 %v482
        %v540 = vunpack.c.h.b16 %v482
        %v541 = vunpack.c.l.b16 %v483
        %v542 = vunpack.c.h.b16 %v483
        %v543 = vunpack.c.l.b16 %v484
        %v544 = vunpack.c.h.b16 %v484
        %v545 = vunpack.c.l.b16 %v485
        %v546 = vunpack.c.h.b16 %v485
        %v547 = vpack.c.b16 %v517, %v515
        %v548 = vpack.c.b16 %v518, %v516
        %v549 = vpack.c.b16 %v521, %v519
        %v550 = vpack.c.b16 %v522, %v520
        %v551 = vpack.c.b16 %v525, %v523
        %v552 = vpack.c.b16 %v526, %v524
        %v553 = vpack.c.b16 %v529, %v527
        %v554 = vpack.c.b16 %v530, %v528
        %v555 = vpack.c.b16 %v533, %v531
        %v556 = vpack.c.b16 %v534, %v532
        %v557 = vpack.c.b16 %v537, %v535
        %v558 = vpack.c.b16 %v538, %v536
        %v559 = vpack.c.b16 %v541, %v539
        %v560 = vpack.c.b16 %v542, %v540
        %v561 = vpack.c.b16 %v545, %v543
        %v562 = vpack.c.b16 %v546, %v544
        %579 = vmatprep.subr.bf16.mxu0 %v562
        %580 = vmatpush1.bf16.msra.mxu0 %v561
        %581 = vmatprep.subr.bf16.mxu0 %v560
        %582 = vmatpush1.bf16.msra.mxu0 %v559
        %583 = vmatprep.subr.bf16.mxu0 %v558
        %584 = vmatpush1.bf16.msra.mxu0 %v557
        %585 = vmatprep.subr.bf16.mxu0 %v556
        %586 = vmatpush1.bf16.msra.mxu0 %v555
        %587 = vmatprep.subr.bf16.mxu0 %v554
        %588 = vmatpush1.bf16.msra.mxu0 %v553
        %589 = vmatprep.subr.bf16.mxu0 %v552
        %590 = vmatpush1.bf16.msra.mxu0 %v551
        %591 = vmatprep.subr.bf16.mxu0 %v550
        %592 = vmatpush1.bf16.msra.mxu0 %v549
        %593 = vmatprep.subr.bf16.mxu0 %v548
        %594 = vmatpush1.bf16.msra.mxu0 %v547
        %595 = vmatprep.subr.bf16.mxu0 0
        %596 = vmatpush2.bf16.msra.mxu0 0
        %597 = vmatprep.subr.bf16.mxu0 0
        %598 = vmatpush2.bf16.msra.mxu0 0
        %599 = vmatprep.subr.bf16.mxu0 0
        %600 = vmatpush2.bf16.msra.mxu0 0
        %601 = vmatprep.subr.bf16.mxu0 0
        %602 = vmatpush2.bf16.msra.mxu0 0
        %603 = vmatprep.subr.bf16.mxu0 0
        %604 = vmatpush2.bf16.msra.mxu0 0
        %605 = vmatprep.subr.bf16.mxu0 0
        %606 = vmatpush2.bf16.msra.mxu0 0
        %607 = vmatprep.subr.bf16.mxu0 0
        %608 = vmatpush2.bf16.msra.mxu0 0
        %609 = vmatprep.subr.bf16.mxu0 0
        %610 = vmatpush2.bf16.msra.mxu0 0
        %611 = vmatprep.mubr.bf16.mxu0 0
        %612 = vmatmul.mubr.bf16.gmra.mxu0 %v283
        %v613 = vpop.f32.mrf.mxu0
        %v614 = vadd.f32 %v492, %v613
        %v615 = vpop.f32.mrf.mxu0
        %v616 = vadd.f32 %v496, %v615
        %v617 = vpop.f32.mrf.mxu0
        %v618 = vpop.f32.mrf.mxu0
        %619 = vdwg.mxu0
        %v620 = vmax.f32 %v614, 0.0
        %v621 = vmax.f32 %v616, 0.0
        %v622 = vpack.c.bf16 %v620, %v620
        %v623 = vpack.c.bf16 %v621, %v621
        %s624 = scalar_lea.vmem [#allocation8], 128
        %v625 = vld [vmem:[%s624] sm:$0xf]
        %v626 = vld [vmem:[%s624 + $0x4] sm:$0xf]
        %v627 = vld [vmem:[%s624 + $0x8] sm:$0xf]
        %v628 = vld [vmem:[%s624 + $0xc] sm:$0xf]
        %v629 = vld [vmem:[%s624 + $0x10] sm:$0xf]
        %v630 = vld [vmem:[%s624 + $0x14] sm:$0xf]
        %v631 = vld [vmem:[%s624 + $0x18] sm:$0xf]
        %v632 = vld [vmem:[%s624 + $0x1c] sm:$0xf]
        %v633 = vld [vmem:[%s624 + $0x20] sm:$0xf]
        %v634 = vld [vmem:[%s624 + $0x24] sm:$0xf]
        %v635 = vld [vmem:[%s624 + $0x28] sm:$0xf]
        %v636 = vld [vmem:[%s624 + $0x2c] sm:$0xf]
        %v637 = vld [vmem:[%s624 + $0x30] sm:$0xf]
        %v638 = vld [vmem:[%s624 + $0x34] sm:$0xf]
        %v639 = vld [vmem:[%s624 + $0x38] sm:$0xf]
        %v640 = vld [vmem:[%s624 + $0x3c] sm:$0xf]
        %v641 = vld [vmem:[%s624 + $0x40] sm:$0xf]
        %v642 = vld [vmem:[%s624 + $0x44] sm:$0xf]
        %v643 = vld [vmem:[%s624 + $0x48] sm:$0xf]
        %v644 = vld [vmem:[%s624 + $0x4c] sm:$0xf]
        %v645 = vld [vmem:[%s624 + $0x50] sm:$0xf]
        %v646 = vld [vmem:[%s624 + $0x54] sm:$0xf]
        %v647 = vld [vmem:[%s624 + $0x58] sm:$0xf]
        %v648 = vld [vmem:[%s624 + $0x5c] sm:$0xf]
        %v649 = vld [vmem:[%s624 + $0x60] sm:$0xf]
        %v650 = vld [vmem:[%s624 + $0x64] sm:$0xf]
        %v651 = vld [vmem:[%s624 + $0x68] sm:$0xf]
        %v652 = vld [vmem:[%s624 + $0x6c] sm:$0xf]
        %v653 = vld [vmem:[%s624 + $0x70] sm:$0xf]
        %v654 = vld [vmem:[%s624 + $0x74] sm:$0xf]
        %v655 = vld [vmem:[%s624 + $0x78] sm:$0xf]
        %v656 = vld [vmem:[%s624 + $0x7c] sm:$0xf]
        %v689 = vunpack.c.l.b16 %v625
        %v690 = vunpack.c.l.b16 %v626
        %v691 = vunpack.c.l.b16 %v627
        %v692 = vunpack.c.l.b16 %v628
        %v693 = vunpack.c.l.b16 %v629
        %v694 = vunpack.c.l.b16 %v630
        %v695 = vunpack.c.l.b16 %v631
        %v696 = vunpack.c.l.b16 %v632
        %v697 = vunpack.c.l.b16 %v633
        %v698 = vunpack.c.l.b16 %v634
        %v699 = vunpack.c.l.b16 %v635
        %v700 = vunpack.c.l.b16 %v636
        %v701 = vunpack.c.l.b16 %v637
        %v702 = vunpack.c.l.b16 %v638
        %v703 = vunpack.c.l.b16 %v639
        %v704 = vunpack.c.l.b16 %v640
        %v705 = vunpack.c.l.b16 %v641
        %v706 = vunpack.c.l.b16 %v642
        %v707 = vunpack.c.l.b16 %v643
        %v708 = vunpack.c.l.b16 %v644
        %v709 = vunpack.c.l.b16 %v645
        %v710 = vunpack.c.l.b16 %v646
        %v711 = vunpack.c.l.b16 %v647
        %v712 = vunpack.c.l.b16 %v648
        %v713 = vunpack.c.l.b16 %v649
        %v714 = vunpack.c.l.b16 %v650
        %v715 = vunpack.c.l.b16 %v651
        %v716 = vunpack.c.l.b16 %v652
        %v717 = vunpack.c.l.b16 %v653
        %v718 = vunpack.c.l.b16 %v654
        %v719 = vunpack.c.l.b16 %v655
        %v720 = vunpack.c.l.b16 %v656
        %v721 = vpack.c.b16 %v690, %v689
        %v722 = vpack.c.b16 %v692, %v691
        %v723 = vpack.c.b16 %v694, %v693
        %v724 = vpack.c.b16 %v696, %v695
        %v725 = vpack.c.b16 %v698, %v697
        %v726 = vpack.c.b16 %v700, %v699
        %v727 = vpack.c.b16 %v702, %v701
        %v728 = vpack.c.b16 %v704, %v703
        %v729 = vpack.c.b16 %v706, %v705
        %v730 = vpack.c.b16 %v708, %v707
        %v731 = vpack.c.b16 %v710, %v709
        %v732 = vpack.c.b16 %v712, %v711
        %v733 = vpack.c.b16 %v714, %v713
        %v734 = vpack.c.b16 %v716, %v715
        %v735 = vpack.c.b16 %v718, %v717
        %v736 = vpack.c.b16 %v720, %v719
        %753 = vmatprep.subr.bf16.mxu0 0
        %754 = vmatpush1.bf16.msra.mxu0 %v728
        %755 = vmatprep.subr.bf16.mxu0 0
        %756 = vmatpush1.bf16.msra.mxu0 %v727
        %757 = vmatprep.subr.bf16.mxu0 0
        %758 = vmatpush1.bf16.msra.mxu0 %v726
        %759 = vmatprep.subr.bf16.mxu0 0
        %760 = vmatpush1.bf16.msra.mxu0 %v725
        %761 = vmatprep.subr.bf16.mxu0 0
        %762 = vmatpush1.bf16.msra.mxu0 %v724
        %763 = vmatprep.subr.bf16.mxu0 0
        %764 = vmatpush1.bf16.msra.mxu0 %v723
        %765 = vmatprep.subr.bf16.mxu0 0
        %766 = vmatpush1.bf16.msra.mxu0 %v722
        %767 = vmatprep.subr.bf16.mxu0 0
        %768 = vmatpush1.bf16.msra.mxu0 %v721
        %769 = vmatprep.subr.bf16.mxu0 0
        %770 = vmatpush2.bf16.msra.mxu0 %v736
        %771 = vmatprep.subr.bf16.mxu0 0
        %772 = vmatpush2.bf16.msra.mxu0 %v735
        %773 = vmatprep.subr.bf16.mxu0 0
        %774 = vmatpush2.bf16.msra.mxu0 %v734
        %775 = vmatprep.subr.bf16.mxu0 0
        %776 = vmatpush2.bf16.msra.mxu0 %v733
        %777 = vmatprep.subr.bf16.mxu0 0
        %778 = vmatpush2.bf16.msra.mxu0 %v732
        %779 = vmatprep.subr.bf16.mxu0 0
        %780 = vmatpush2.bf16.msra.mxu0 %v731
        %781 = vmatprep.subr.bf16.mxu0 0
        %782 = vmatpush2.bf16.msra.mxu0 %v730
        %783 = vmatprep.subr.bf16.mxu0 0
        %784 = vmatpush2.bf16.msra.mxu0 %v729
        %785 = vmatprep.mubr.bf16.mxu0 %v623
        %786 = vmatmul.mubr.bf16.gmra.mxu0 %v622
        %v787 = vpop.f32.mrf.mxu0
        %v788 = vadd.f32 0.0, %v787
        %v789 = vpop.f32.mrf.mxu0
        %v790 = vpop.f32.mrf.mxu0
        %v791 = vpop.f32.mrf.mxu0
        %792 = vdwg.mxu0
        %v825 = vunpack.c.l.b16 %v437
        %v826 = vunpack.c.l.b16 %v438
        %v827 = vunpack.c.l.b16 %v439
        %v828 = vunpack.c.l.b16 %v440
        %v829 = vunpack.c.l.b16 %v441
        %v830 = vunpack.c.l.b16 %v442
        %v831 = vunpack.c.l.b16 %v443
        %v832 = vunpack.c.l.b16 %v444
        %v833 = vunpack.c.l.b16 %v445
        %v834 = vunpack.c.l.b16 %v446
        %v835 = vunpack.c.l.b16 %v447
        %v836 = vunpack.c.l.b16 %v448
        %v837 = vunpack.c.l.b16 %v449
        %v838 = vunpack.c.l.b16 %v450
        %v839 = vunpack.c.l.b16 %v451
        %v840 = vunpack.c.l.b16 %v452
        %v841 = vunpack.c.l.b16 %v453
        %v842 = vunpack.c.l.b16 %v454
        %v843 = vunpack.c.l.b16 %v455
        %v844 = vunpack.c.l.b16 %v456
        %v845 = vunpack.c.l.b16 %v457
        %v846 = vunpack.c.l.b16 %v458
        %v847 = vunpack.c.l.b16 %v459
        %v848 = vunpack.c.l.b16 %v460
        %v849 = vunpack.c.l.b16 %v461
        %v850 = vunpack.c.l.b16 %v462
        %v851 = vunpack.c.l.b16 %v463
        %v852 = vunpack.c.l.b16 %v464
        %v853 = vunpack.c.l.b16 %v465
        %v854 = vunpack.c.l.b16 %v466
        %v855 = vunpack.c.l.b16 %v467
        %v856 = vunpack.c.l.b16 %v468
        %v857 = vpack.c.b16 %v826, %v825
        %v858 = vpack.c.b16 %v828, %v827
        %v859 = vpack.c.b16 %v830, %v829
        %v860 = vpack.c.b16 %v832, %v831
        %v861 = vpack.c.b16 %v834, %v833
        %v862 = vpack.c.b16 %v836, %v835
        %v863 = vpack.c.b16 %v838, %v837
        %v864 = vpack.c.b16 %v840, %v839
        %v865 = vpack.c.b16 %v842, %v841
        %v866 = vpack.c.b16 %v844, %v843
        %v867 = vpack.c.b16 %v846, %v845
        %v868 = vpack.c.b16 %v848, %v847
        %v869 = vpack.c.b16 %v850, %v849
        %v870 = vpack.c.b16 %v852, %v851
        %v871 = vpack.c.b16 %v854, %v853
        %v872 = vpack.c.b16 %v856, %v855
        %889 = vmatprep.subr.bf16.mxu0 0
        %890 = vmatpush1.bf16.msra.mxu0 %v864
        %891 = vmatprep.subr.bf16.mxu0 0
        %892 = vmatpush1.bf16.msra.mxu0 %v863
        %893 = vmatprep.subr.bf16.mxu0 0
        %894 = vmatpush1.bf16.msra.mxu0 %v862
        %895 = vmatprep.subr.bf16.mxu0 0
        %896 = vmatpush1.bf16.msra.mxu0 %v861
        %897 = vmatprep.subr.bf16.mxu0 0
        %898 = vmatpush1.bf16.msra.mxu0 %v860
        %899 = vmatprep.subr.bf16.mxu0 0
        %900 = vmatpush1.bf16.msra.mxu0 %v859
        %901 = vmatprep.subr.bf16.mxu0 0
        %902 = vmatpush1.bf16.msra.mxu0 %v858
        %903 = vmatprep.subr.bf16.mxu0 0
        %904 = vmatpush1.bf16.msra.mxu0 %v857
        %905 = vmatprep.subr.bf16.mxu0 0
        %906 = vmatpush2.bf16.msra.mxu0 %v872
        %907 = vmatprep.subr.bf16.mxu0 0
        %908 = vmatpush2.bf16.msra.mxu0 %v871
        %909 = vmatprep.subr.bf16.mxu0 0
        %910 = vmatpush2.bf16.msra.mxu0 %v870
        %911 = vmatprep.subr.bf16.mxu0 0
        %912 = vmatpush2.bf16.msra.mxu0 %v869
        %913 = vmatprep.subr.bf16.mxu0 0
        %914 = vmatpush2.bf16.msra.mxu0 %v868
        %915 = vmatprep.subr.bf16.mxu0 0
        %916 = vmatpush2.bf16.msra.mxu0 %v867
        %917 = vmatprep.subr.bf16.mxu0 0
        %918 = vmatpush2.bf16.msra.mxu0 %v866
        %919 = vmatprep.subr.bf16.mxu0 0
        %920 = vmatpush2.bf16.msra.mxu0 %v865
        %921 = vmatprep.mubr.bf16.mxu0 %v436
        %922 = vmatmul.mubr.bf16.gmra.mxu0 %v435
        %v923 = vpop.f32.mrf.mxu0
        %v924 = vadd.f32 %v788, %v923
        %v925 = vpop.f32.mrf.mxu0
        %v926 = vpop.f32.mrf.mxu0
        %v927 = vpop.f32.mrf.mxu0
        %928 = vdwg.mxu0
        %v929 = vld [vmem:[%s4] sm:$0x1]
        %v931 = vlaneseq
        %v932 = vshrl.u32 %v931, 7
        %v933 = vsub.s32 0, %v932
        %v934 = vrot.slane %v929, %v933
        %v936 = vadd.f32 %v924, %v934
        %937 = vst [vmem:[%s281] sm:$0xff] %v936
        %s938 = sand.u32 %s142, 1
        %s939 = scalar_lea.sflag [#allocation4], %s938
        %s940 = sand.u32 %s142, 1
        %s941 = smul.addr %s940, 8
        %s942 = scalar_lea.vmem [#allocation10], %s941
        // Predicated region
        $region57: #{tpu_custom_call.1} parent=39 // pred_check
          %p943 = pneg %p152
        $region58: #{tpu_custom_call.1} parent=39 // pred_check_branch
          %945 = sbr.rel (%p943) target = $region60
        $region59: #{tpu_custom_call.1} parent=39 // pred_region
          %s947 = ssub.s32 128, 128
          %948 = vsyncadd %s939, %s947
          %s949 = smul.addr %s24, 128
          %s950 = scalar_lea.hbm %s5, %s949
          %s952 = sshll.u32 %s942, 4
          %s953 = int_to_ptr.vmem [resolvable:$true] %s952
          %955 = dma.vmem_to_hbm [thread:$0]  %s953, 128, %s950, %s939
        $region60: #{tpu_custom_call.1} parent=39 // pred_fallthru
          _
      $region40: #{tpu_custom_call.1} parent=5 // pred_fallthru
        _
      %p956 = scmp.le.s32.totalorder 2, %s19
      // Predicated region
      $region61: #{tpu_custom_call.1} parent=5 // pred_check
        %p957 = pneg %p956
      $region62: #{tpu_custom_call.1} parent=5 // pred_check_branch
        %959 = sbr.rel (%p957) target = $region64
      $region63: #{tpu_custom_call.1} parent=5 // pred_region
        %s960 = ssub.s32 %s19, 2
        // Predicated region
        $region65: #{tpu_custom_call.1} parent=63 // pred_check
          %p961 = pneg %p158
        $region66: #{tpu_custom_call.1} parent=63 // pred_check_branch
          %963 = sbr.rel (%p961) target = $region68
        $region67: #{tpu_custom_call.1} parent=63 // pred_region
          %s964 = sand.u32 %s143, 1
          %s965 = scalar_lea.sflag [#allocation4], %s964
          %s966 = sand.u32 %s143, 1
          %s967 = smul.addr %s966, 8
          %s968 = scalar_lea.vmem [#allocation10], %s967
          %969 = dma.done %s965, 128
        $region68: #{tpu_custom_call.1} parent=63 // pred_fallthru
          _
      $region64: #{tpu_custom_call.1} parent=5 // pred_fallthru
        _
    $region6: #{tpu_custom_call.1} parent=1 // loop_footer
      %s23 = sadd.s32 1, %s19
    $region7: #{tpu_custom_call.1} parent=1 // loop_footer_branch
      %18 = sbr.rel target = $region3
    $region8: #{tpu_custom_call.1} parent=1 // loop_exit
      _
    %970 = vsyncpa [#allocation3], 1
    %s971 = scalar_lea.sflag [#allocation3], 1
    %972 = vsyncpa %s971, 1
    %973 = vsyncpa [#allocation6], 1
    %974 = vsyncpa [#allocation9], 1
    %975 = vsyncpa [#allocation4], 1
    %s976 = scalar_lea.sflag [#allocation4], 1
    %977 = vsyncpa %s976, 1

</llo_original>
